<compile_context>
chip_gen: v6e
topology: v6e:2x2x1
jax: 0.10.0
libtpu: 0.0.40
codegen_flags: <defaults>
</compile_context>

<pallas_src>
import jax
import jax.numpy as jnp
from jax.experimental import pallas as pl
from jax.experimental.pallas import tpu as pltpu


def _pick_tile(dim, pref, align):
    """Largest multiple of `align` that divides `dim` and is <= `pref`.

    Falls back to the full dimension when it is not align-divisible (allowed:
    a block equal to the full array dim bypasses the (8,128) constraint).
    """
    if dim % align != 0:
        return dim
    t = min(pref, dim)
    t -= t % align
    while t > align and dim % t != 0:
        t -= align
    return max(t, align)


def _simple_binary_net_kernel(u_ref, x_ref, w_ref, o_ref, acc_ref):
    # u_ref   : VMEM (TM, TN) f32   uniform thresholds in [0, 1)
    # x_ref   : VMEM (TM, TK) bf16  input rows
    # w_ref   : VMEM (TN, TK) bf16  weight in PyTorch (out_features, in_features) layout
    # o_ref   : VMEM (TM, TN) f32   binary {0., 1.} activations
    # acc_ref : VMEM (TM, TN) f32   matmul accumulator (lives across the K axis)
    k = pl.program_id(2)

    @pl.when(k == 0)
    def _():
        acc_ref[...] = jnp.zeros_like(acc_ref)

    # fc1 partial product: (TM, TK) x (TN, TK) contracted on K -> (TM, TN).
    # Contracting on dim 1 of both operands consumes the (out, in) weight
    # layout directly on the MXU -- no materialized transpose.
    acc_ref[...] += jax.lax.dot_general(
        x_ref[...],
        w_ref[...],
        dimension_numbers=(((1,), (1,)), ((), ())),
        preferred_element_type=jnp.float32,
    )

    @pl.when(k == pl.num_programs(2) - 1)
    def _():
        # StochasticBinaryActivation: p = sigmoid(y); out = Bernoulli(p)
        p = jax.nn.sigmoid(acc_ref[...])               # EUP
        o_ref[...] = (u_ref[...] < p).astype(o_ref.dtype)  # single VPU compare


def simple_binary_net(x, w, key, *, tm=None, tn=None, tk=None):
    """Forward pass of SimpleBinaryNet.

    x   : (B, N_in)  float32
    w   : (N_out, N_in) float32, PyTorch nn.Linear convention (out, in)
    key : jax PRNG key for the stochastic binarization
    """
    B, n_in = x.shape
    n_out, n_in_w = w.shape
    assert n_in == n_in_w, "weight / input feature mismatch"

    # Tile budget: 512-wide feature tiles keep the bf16 weight tile at 512 KiB
    # (x2 double-buffering) -- comfortably inside v7x's 64 MiB VMEM and aligned
    # for both the 4x128 (v5e) and 2x256 (v6e/v7x) MXUs.
    tm = tm or _pick_tile(B, 128, 8)
    tn = tn or _pick_tile(n_out, 512, 128)
    tk = tk or _pick_tile(n_in, 512, 128)

    # Bernoulli uniforms generated once per call (deterministic given `key`).
    u = jax.random.uniform(key, (B, n_out), dtype=jnp.float32)

    # bf16 operands for the MXU; accumulation stays f32. For a binary
    # stochastic output the bf16 pre-activation precision is irrelevant.
    xb = x.astype(jnp.bfloat16)
    wb = w.astype(jnp.bfloat16)

    grid = (B // tm, n_out // tn, n_in // tk)

    return pl.pallas_call(
        _simple_binary_net_kernel,
        out_shape=jax.ShapeDtypeStruct((B, n_out), jnp.float32),
        grid_spec=pltpu.PrefetchScalarGridSpec(
            num_scalar_prefetch=0,
            grid=grid,
            in_specs=[
                pl.BlockSpec((tm, tn), lambda i, j, k: (i, j)),  # uniforms
                pl.BlockSpec((tm, tk), lambda i, j, k: (i, k)),  # x
                pl.BlockSpec((tn, tk), lambda i, j, k: (j, k)),  # w (out, in)
            ],
            out_specs=pl.BlockSpec((tm, tn), lambda i, j, k: (i, j)),
            scratch_shapes=[pltpu.VMEM((tm, tn), jnp.float32)],
        ),
        compiler_params=pltpu.CompilerParams(
            dimension_semantics=("parallel", "parallel", "arbitrary"),
        ),
    )(u, xb, wb)


if __name__ == "__main__":
    # input_size = input_length * alphabet_size; pick 32 * 4 = 128 (lane-aligned).
    B, N = 8, 128

    key = jax.random.PRNGKey(0)
    kx, kw, kb = jax.random.split(key, 3)

    x = jax.random.normal(kx, (B, N), dtype=jnp.float32)

    # Deterministic init matching nn.Linear default: U(-1/sqrt(fan_in), 1/sqrt(fan_in)).
    bound = 1.0 / jnp.sqrt(jnp.float32(N))
    w = jax.random.uniform(kw, (N, N), dtype=jnp.float32, minval=-bound, maxval=bound)

    out = simple_binary_net(x, w, kb)
    out = jax.block_until_ready(out)

    # Sanity: output must be binary {0, 1} with the right shape/dtype.
    assert out.shape == (B, N) and out.dtype == jnp.float32
    assert bool(jnp.all((out == 0.0) | (out == 1.0)))

    print("KERNEL_OK")
</pallas_src>

<mosaic_0001>
module attributes {stable_mosaic.version = 11 : i64} {
  func.func @_simple_binary_net_kernel(%arg0: i32, %arg1: i32, %arg2: i32, %arg3: memref<8x128xf32, #tpu.memory_space<vmem>>, %arg4: memref<8x128xbf16, #tpu.memory_space<vmem>>, %arg5: memref<128x128xbf16, #tpu.memory_space<vmem>>, %arg6: memref<8x128xf32, #tpu.memory_space<vmem>>, %arg7: memref<8x128xf32, #tpu.memory_space<vmem>>) attributes {dimension_semantics = [#tpu.dimension_semantics<parallel>, #tpu.dimension_semantics<parallel>, #tpu.dimension_semantics<arbitrary>], iteration_bounds = array<i64: 1, 1, 1>, scalar_prefetch = 0 : i64, scratch_operands = 1 : i64, tpu.core_type = #tpu.core_type<tc>, window_params = [{transform_indices = @transform_0, window_bounds = array<i64: 8, 128>}, {transform_indices = @transform_1, window_bounds = array<i64: 8, 128>}, {transform_indices = @transform_2, window_bounds = array<i64: 128, 128>}, {transform_indices = @transform_3, window_bounds = array<i64: 8, 128>}]} {
    %c0_i32 = arith.constant 0 : i32
    %0 = arith.cmpi eq, %arg2, %c0_i32 : i32
    %1 = arith.extui %0 : i1 to i32
    %c0_i32_0 = arith.constant 0 : i32
    %2 = arith.cmpi ne, %1, %c0_i32_0 : i32
    scf.if %2 {
      %cst_10 = arith.constant 0.000000e+00 : f32
      %12 = vector.broadcast %cst_10 : f32 to vector<8x128xf32>
      %c0_11 = arith.constant 0 : index
      %c0_12 = arith.constant 0 : index
      %13 = vector.load %arg7[%c0_11, %c0_12] : memref<8x128xf32, #tpu.memory_space<vmem>>, vector<8x128xf32>
      tpu.vector_store %arg7[%c0_11, %c0_12], %12 {strides = array<i32>} : memref<8x128xf32, #tpu.memory_space<vmem>>, vector<8x128xf32>,
    } else {
    }
    %c0 = arith.constant 0 : index
    %c0_1 = arith.constant 0 : index
    %3 = vector.load %arg7[%c0, %c0_1] : memref<8x128xf32, #tpu.memory_space<vmem>>, vector<8x128xf32>
    %c0_2 = arith.constant 0 : index
    %c0_3 = arith.constant 0 : index
    %4 = vector.load %arg4[%c0_2, %c0_3] : memref<8x128xbf16, #tpu.memory_space<vmem>>, vector<8x128xbf16>
    %c0_4 = arith.constant 0 : index
    %c0_5 = arith.constant 0 : index
    %5 = vector.load %arg5[%c0_4, %c0_5] : memref<128x128xbf16, #tpu.memory_space<vmem>>, vector<128x128xbf16>
    %cst = arith.constant dense<0.000000e+00> : vector<8x128xf32>
    %6 = tpu.matmul %4, %5, %cst {dimension_numbers = #tpu.dot_dimension_numbers<[1], [1], [0], [0], [0, 0, 1, 0], [], []>} : vector<8x128xbf16>, vector<128x128xbf16>, vector<8x128xf32> -> vector<8x128xf32>
    %7 = arith.addf %3, %6 : vector<8x128xf32>
    %c0_6 = arith.constant 0 : index
    %c0_7 = arith.constant 0 : index
    %8 = vector.load %arg7[%c0_6, %c0_7] : memref<8x128xf32, #tpu.memory_space<vmem>>, vector<8x128xf32>
    tpu.vector_store %arg7[%c0_6, %c0_7], %7 {strides = array<i32>} : memref<8x128xf32, #tpu.memory_space<vmem>>, vector<8x128xf32>,
    %c0_i32_8 = arith.constant 0 : i32
    %9 = arith.cmpi eq, %arg2, %c0_i32_8 : i32
    %10 = arith.extui %9 : i1 to i32
    %c0_i32_9 = arith.constant 0 : i32
    %11 = arith.cmpi ne, %10, %c0_i32_9 : i32
    scf.if %11 {
      %c0_10 = arith.constant 0 : index
      %c0_11 = arith.constant 0 : index
      %12 = vector.load %arg7[%c0_10, %c0_11] : memref<8x128xf32, #tpu.memory_space<vmem>>, vector<8x128xf32>
      %13 = arith.negf %12 : vector<8x128xf32>
      %14 = math.exp %13 : vector<8x128xf32>
      %cst_12 = arith.constant 1.000000e+00 : f32
      %15 = vector.broadcast %cst_12 : f32 to vector<8x128xf32>
      %16 = arith.addf %15, %14 : vector<8x128xf32>
      %17 = arith.divf %15, %16 : vector<8x128xf32>
      %c0_13 = arith.constant 0 : index
      %c0_14 = arith.constant 0 : index
      %18 = vector.load %arg3[%c0_13, %c0_14] : memref<8x128xf32, #tpu.memory_space<vmem>>, vector<8x128xf32>
      %19 = arith.cmpf olt, %18, %17 : vector<8x128xf32>
      %20 = arith.extui %19 : vector<8x128xi1> to vector<8x128xi32>
      %21 = arith.sitofp %20 : vector<8x128xi32> to vector<8x128xf32>
      %c0_15 = arith.constant 0 : index
      %c0_16 = arith.constant 0 : index
      %22 = vector.load %arg6[%c0_15, %c0_16] : memref<8x128xf32, #tpu.memory_space<vmem>>, vector<8x128xf32>
      tpu.vector_store %arg6[%c0_15, %c0_16], %21 {strides = array<i32>} : memref<8x128xf32, #tpu.memory_space<vmem>>, vector<8x128xf32>,
    } else {
    }
    return
  }
  func.func @transform_0(%arg0: i32, %arg1: i32, %arg2: i32) -> (i32, i32) {
    %c0_i32 = arith.constant 0 : i32
    return %arg0, %arg1 : i32, i32
  }
  func.func @transform_1(%arg0: i32, %arg1: i32, %arg2: i32) -> (i32, i32) {
    %c0_i32 = arith.constant 0 : i32
    return %arg0, %arg2 : i32, i32
  }
  func.func @transform_2(%arg0: i32, %arg1: i32, %arg2: i32) -> (i32, i32) {
    %c0_i32 = arith.constant 0 : i32
    return %arg1, %arg2 : i32, i32
  }
  func.func @transform_3(%arg0: i32, %arg1: i32, %arg2: i32) -> (i32, i32) {
    %c0_i32 = arith.constant 0 : i32
    return %arg0, %arg1 : i32, i32
  }
}

</mosaic_0001>

<llo_original>
// kernel: tpu_custom_call.1
$region0: #{tpu_custom_call.1}
  #allocation0 [shape = 'u32[]', space=smem, size = 0x4, offset = 0x4, fixed_abs, tag = 'smem constant byte address 0x4 - core index']
  #allocation1 [shape = 'u32[144,128]{1,0:T(1,128)}', space=vmem, size = 0x12000, scoped, tag = 'internal scratch']
  #allocation2 [shape = 'f32[8,128]{1,0:T(8,128)}', space=vmem, size = 0x1000, scoped, tag = 'scratch operand']
  %s0 = inlined_call_operand.hbm [shape: f32[8,128], index: 0, kind: input, shape index: {}]
  %s1 = inlined_call_operand.hbm [shape: bf16[8,128], index: 1, kind: input, shape index: {}]
  %s2 = inlined_call_operand.hbm [shape: bf16[128,128], index: 2, kind: input, shape index: {}]
  %s3 = inlined_call_operand.hbm [shape: f32[8,128], index: 3, kind: output, shape index: {}]
  %s4 = sld [smem:[#allocation0]]
  $region42: #{tpu_custom_call.1} parent=0
    _
  %s6 = ssub.s32 1, %s4
  %s7 = scalar_select 0, %s6, %s4
  $region1: #{tpu_custom_call.1} parent=0
    #allocation3 [shape = 'u8[4096]{0}', space=vmem, size = 0x1000, scoped, tag = 'input window, operand 0, single buffered']
    #allocation4 [shape = 's32[1]{0}', space=sflag, size = 0x4, scoped, tag = 'scoped memory for tpu_custom_call.1']
    #allocation5 [shape = 's32[1]{0}', space=sflag, size = 0x4, scoped, tag = 'scoped memory for tpu_custom_call.1']
    #allocation6 [shape = 'u8[2048]{0}', space=vmem, size = 0x800, scoped, tag = 'input window, operand 1, single buffered']
    #allocation7 [shape = 's32[1]{0}', space=sflag, size = 0x4, scoped, tag = 'scoped memory for tpu_custom_call.1']
    #allocation8 [shape = 'u8[32768]{0}', space=vmem, size = 0x8000, scoped, tag = 'input window, operand 2, single buffered']
    #allocation9 [shape = 'u8[4096]{0}', space=vmem, size = 0x1000, scoped, tag = 'output window, operand 0, single buffered']
    %8 = vsyncpa [#allocation4], 0
    %9 = vsyncpa [#allocation7], 0
    %10 = vsyncpa [#allocation5], 0
    // Predicated region
    $region2: #{tpu_custom_call.1} parent=1 // pred_check
      _
    $region3: #{tpu_custom_call.1} parent=1 // pred_check_branch
      %12 = sbr.rel (0) target = $region5
    $region4: #{tpu_custom_call.1} parent=1 // pred_region
      %s14 = ssub.s32 128, 128
      %15 = vsyncadd [#allocation4], %s14
      %s17 = sshll.u32 [#allocation3], 4
      %s18 = int_to_ptr.vmem [resolvable:$true] %s17
      %20 = dma.hbm_to_vmem [thread:$0]  %s0, 128, %s18, [#allocation4]
    $region5: #{tpu_custom_call.1} parent=1 // pred_fallthru
      _
    // Predicated region
    $region6: #{tpu_custom_call.1} parent=1 // pred_check
      _
    $region7: #{tpu_custom_call.1} parent=1 // pred_check_branch
      %22 = sbr.rel (0) target = $region9
    $region8: #{tpu_custom_call.1} parent=1 // pred_region
      %s24 = ssub.s32 64, 64
      %25 = vsyncadd [#allocation7], %s24
      %s27 = sshll.u32 [#allocation6], 4
      %s28 = int_to_ptr.vmem [resolvable:$true] %s27
      %30 = dma.hbm_to_vmem [thread:$0]  %s1, 64, %s28, [#allocation7]
    $region9: #{tpu_custom_call.1} parent=1 // pred_fallthru
      _
    // Predicated region
    $region10: #{tpu_custom_call.1} parent=1 // pred_check
      _
    $region11: #{tpu_custom_call.1} parent=1 // pred_check_branch
      %32 = sbr.rel (0) target = $region13
    $region12: #{tpu_custom_call.1} parent=1 // pred_region
      %s34 = ssub.s32 1024, 1024
      %35 = vsyncadd [#allocation7], %s34
      %s36 = sshll.u32 [#allocation8], 4
      %s37 = int_to_ptr.vmem [resolvable:$true] %s36
      %42 = dma.hbm_to_vmem [thread:$0]  %s2, 1024, %s37, [#allocation7], 64, 64, 4
    $region13: #{tpu_custom_call.1} parent=1 // pred_fallthru
      _
    // Predicated region
    $region14: #{tpu_custom_call.1} parent=1 // pred_check
      _
    $region15: #{tpu_custom_call.1} parent=1 // pred_check_branch
      %44 = sbr.rel (0) target = $region17
    $region16: #{tpu_custom_call.1} parent=1 // pred_region
      %45 = dma.done [#allocation4], 128
    $region17: #{tpu_custom_call.1} parent=1 // pred_fallthru
      _
    // Predicated region
    $region18: #{tpu_custom_call.1} parent=1 // pred_check
      _
    $region19: #{tpu_custom_call.1} parent=1 // pred_check_branch
      %47 = sbr.rel (0) target = $region21
    $region20: #{tpu_custom_call.1} parent=1 // pred_region
      %48 = dma.done [#allocation7], 64
    $region21: #{tpu_custom_call.1} parent=1 // pred_fallthru
      _
    // Predicated region
    $region22: #{tpu_custom_call.1} parent=1 // pred_check
      _
    $region23: #{tpu_custom_call.1} parent=1 // pred_check_branch
      %50 = sbr.rel (0) target = $region25
    $region24: #{tpu_custom_call.1} parent=1 // pred_region
      %51 = dma.done [#allocation7], 1024
    $region25: #{tpu_custom_call.1} parent=1 // pred_fallthru
      _
    %p53 = scmp.eq.s32.totalorder 0, 0
    // Predicated region
    $region26: #{tpu_custom_call.1} parent=1 // pred_check
      %p54 = pneg %p53
    $region27: #{tpu_custom_call.1} parent=1 // pred_check_branch
      %56 = sbr.rel (%p54) target = $region29
    $region28: #{tpu_custom_call.1} parent=1 // pred_region
      %57 = vst [vmem:[#allocation2] sm:$0xff] 0.0
    $region29: #{tpu_custom_call.1} parent=1 // pred_fallthru
      _
    %v58 = vld [vmem:[#allocation2] sm:$0xff]
    %v59 = vld [vmem:[#allocation6] sm:$0xf]
    %v60 = vld [vmem:[#allocation8] sm:$0xf]
    %v61 = vld [vmem:[#allocation8 + $0x4] sm:$0xf]
    %v62 = vld [vmem:[#allocation8 + $0x8] sm:$0xf]
    %v63 = vld [vmem:[#allocation8 + $0xc] sm:$0xf]
    %v64 = vld [vmem:[#allocation8 + $0x10] sm:$0xf]
    %v65 = vld [vmem:[#allocation8 + $0x14] sm:$0xf]
    %v66 = vld [vmem:[#allocation8 + $0x18] sm:$0xf]
    %v67 = vld [vmem:[#allocation8 + $0x1c] sm:$0xf]
    %v68 = vld [vmem:[#allocation8 + $0x20] sm:$0xf]
    %v69 = vld [vmem:[#allocation8 + $0x24] sm:$0xf]
    %v70 = vld [vmem:[#allocation8 + $0x28] sm:$0xf]
    %v71 = vld [vmem:[#allocation8 + $0x2c] sm:$0xf]
    %v72 = vld [vmem:[#allocation8 + $0x30] sm:$0xf]
    %v73 = vld [vmem:[#allocation8 + $0x34] sm:$0xf]
    %v74 = vld [vmem:[#allocation8 + $0x38] sm:$0xf]
    %v75 = vld [vmem:[#allocation8 + $0x3c] sm:$0xf]
    %v92 = vunpack.c.l.b16 %v60
    %v93 = vunpack.c.l.b16 %v61
    %v94 = vunpack.c.l.b16 %v62
    %v95 = vunpack.c.l.b16 %v63
    %v96 = vunpack.c.l.b16 %v64
    %v97 = vunpack.c.l.b16 %v65
    %v98 = vunpack.c.l.b16 %v66
    %v99 = vunpack.c.l.b16 %v67
    %v100 = vunpack.c.l.b16 %v68
    %v101 = vunpack.c.l.b16 %v69
    %v102 = vunpack.c.l.b16 %v70
    %v103 = vunpack.c.l.b16 %v71
    %v104 = vunpack.c.l.b16 %v72
    %v105 = vunpack.c.l.b16 %v73
    %v106 = vunpack.c.l.b16 %v74
    %v107 = vunpack.c.l.b16 %v75
    %v108 = vpack.c.b16 %v93, %v92
    %v109 = vpack.c.b16 %v95, %v94
    %v110 = vpack.c.b16 %v97, %v96
    %v111 = vpack.c.b16 %v99, %v98
    %v112 = vpack.c.b16 %v101, %v100
    %v113 = vpack.c.b16 %v103, %v102
    %v114 = vpack.c.b16 %v105, %v104
    %v115 = vpack.c.b16 %v107, %v106
    %124 = vmatprep.subr.bf16.mxu0 0
    %125 = vmatpush1.bf16.xpose.msra.mxu0 %v115
    %126 = vmatprep.subr.bf16.mxu0 0
    %127 = vmatpush1.bf16.xpose.msra.mxu0 %v114
    %128 = vmatprep.subr.bf16.mxu0 0
    %129 = vmatpush1.bf16.xpose.msra.mxu0 %v113
    %130 = vmatprep.subr.bf16.mxu0 0
    %131 = vmatpush1.bf16.xpose.msra.mxu0 %v112
    %132 = vmatprep.subr.bf16.mxu0 0
    %133 = vmatpush1.bf16.xpose.msra.mxu0 %v111
    %134 = vmatprep.subr.bf16.mxu0 0
    %135 = vmatpush1.bf16.xpose.msra.mxu0 %v110
    %136 = vmatprep.subr.bf16.mxu0 0
    %137 = vmatpush1.bf16.xpose.msra.mxu0 %v109
    %138 = vmatprep.subr.bf16.mxu0 0
    %139 = vmatpush1.bf16.xpose.msra.mxu0 %v108
    %140 = vmatprep.subr.bf16.mxu0 0
    %141 = vmatpush2.bf16.xpose.msra.mxu0 0
    %142 = vmatprep.subr.bf16.mxu0 0
    %143 = vmatpush2.bf16.xpose.msra.mxu0 0
    %144 = vmatprep.subr.bf16.mxu0 0
    %145 = vmatpush2.bf16.xpose.msra.mxu0 0
    %146 = vmatprep.subr.bf16.mxu0 0
    %147 = vmatpush2.bf16.xpose.msra.mxu0 0
    %148 = vmatprep.subr.bf16.mxu0 0
    %149 = vmatpush2.bf16.xpose.msra.mxu0 0
    %150 = vmatprep.subr.bf16.mxu0 0
    %151 = vmatpush2.bf16.xpose.msra.mxu0 0
    %152 = vmatprep.subr.bf16.mxu0 0
    %153 = vmatpush2.bf16.xpose.msra.mxu0 0
    %154 = vmatprep.subr.bf16.mxu0 0
    %155 = vmatpush2.bf16.xpose.msra.mxu0 0
    %156 = vmatprep.mubr.bf16.mxu0 0
    %157 = vmatmul.mubr.bf16.gmra.mxu0 %v59
    %v158 = vpop.f32.mrf.mxu0
    %v159 = vadd.f32 0.0, %v158
    %v160 = vpop.f32.mrf.mxu0
    %v161 = vpop.f32.mrf.mxu0
    %v162 = vpop.f32.mrf.mxu0
    %163 = vdwg.mxu0
    %v164 = vadd.f32 %v58, %v159
    %165 = vst [vmem:[#allocation2] sm:$0xff] %v164
    // Predicated region
    $region30: #{tpu_custom_call.1} parent=1 // pred_check
      %p166 = pneg %p53
    $region31: #{tpu_custom_call.1} parent=1 // pred_check_branch
      %168 = sbr.rel (%p166) target = $region33
    $region32: #{tpu_custom_call.1} parent=1 // pred_region
      %v169 = vld [vmem:[#allocation2] sm:$0xff]
      %v170 = vxor.u32 %v169, 2147483648
      %v171 = vmul.f32 %v170, 1.442695
      %v172 = vpow.pop %v171
      %v173 = vadd.f32 %v172, 1.0
      %v174 = vrcp.pop %v173
      %v175 = vmul.f32 1.0, %v174
      %v176 = vld [vmem:[#allocation3] sm:$0xff]
      %vm177 = vcmp.lt.f32.partialorder %v176, %v175
      %v178 = vsel %vm177, 1, 0
      %v179 = vcvt.s32.f32 %v178
      %180 = vst [vmem:[#allocation9] sm:$0xff] %v179
    $region33: #{tpu_custom_call.1} parent=1 // pred_fallthru
      _
    // Predicated region
    $region34: #{tpu_custom_call.1} parent=1 // pred_check
      _
    $region35: #{tpu_custom_call.1} parent=1 // pred_check_branch
      %182 = sbr.rel (0) target = $region37
    $region36: #{tpu_custom_call.1} parent=1 // pred_region
      %s184 = ssub.s32 128, 128
      %185 = vsyncadd [#allocation5], %s184
      %s187 = sshll.u32 [#allocation9], 4
      %s188 = int_to_ptr.vmem [resolvable:$true] %s187
      %190 = dma.vmem_to_hbm [thread:$0]  %s188, 128, %s3, [#allocation5]
    $region37: #{tpu_custom_call.1} parent=1 // pred_fallthru
      _
    // Predicated region
    $region38: #{tpu_custom_call.1} parent=1 // pred_check
      _
    $region39: #{tpu_custom_call.1} parent=1 // pred_check_branch
      %192 = sbr.rel (0) target = $region41
    $region40: #{tpu_custom_call.1} parent=1 // pred_region
      %193 = dma.done [#allocation5], 128
    $region41: #{tpu_custom_call.1} parent=1 // pred_fallthru
      _
    %194 = vsyncpa [#allocation4], 1
    %195 = vsyncpa [#allocation7], 1
    %196 = vsyncpa [#allocation5], 1

</llo_original>
